<compile_context>
chip_gen: v7x
topology: tpu7x:2x2x1
jax: 0.10.0
libtpu: 0.0.40
codegen_flags: <defaults>
</compile_context>

<pallas_src>
import jax
import jax.numpy as jnp
from jax.experimental import pallas as pl
from jax.experimental.pallas import tpu as pltpu

IN_FEATURES = 6
OUT_FEATURES = 6
SUBLANE = 8          # sublane width (second-to-last dim alignment)
MAX_BLOCK_ROWS = 2048  # batch-tile size; 2048*6*4B = 48 KiB per x tile


def _linear_kernel(x_ref, w_ref, b_ref, o_ref):
    # x_ref: [TB, 6], w_ref: [6, 6] (in, out), b_ref: [1, 6], o_ref: [TB, 6]
    acc = jnp.dot(x_ref[...], w_ref[...], preferred_element_type=jnp.float32)
    o_ref[...] = (acc + b_ref[...]).astype(o_ref.dtype)


def attention_net_forward(vo, weight, bias):
    """vo: [B, 6]; weight: [6, 6] (out, in); bias: [6]. Returns [B, 6] f32."""
    B, F = vo.shape
    assert F == IN_FEATURES

    # Pad only the batch axis, to a multiple of the sublane width.
    B8 = ((B + SUBLANE - 1) // SUBLANE) * SUBLANE
    x = vo.astype(jnp.float32)
    if B8 != B:
        x = jnp.pad(x, ((0, B8 - B), (0, 0)))

    # Batch tile: multiple of 8, capped at MAX_BLOCK_ROWS.
    TB = min(MAX_BLOCK_ROWS, B8)
    grid = (pl.cdiv(B8, TB),)

    w_t = weight.T.astype(jnp.float32)                 # [in, out] = [6, 6]
    b_2d = bias.astype(jnp.float32).reshape(1, OUT_FEATURES)

    out_p = pl.pallas_call(
        _linear_kernel,
        out_shape=jax.ShapeDtypeStruct((B8, OUT_FEATURES), jnp.float32),
        grid_spec=pltpu.PrefetchScalarGridSpec(
            num_scalar_prefetch=0,
            grid=grid,
            in_specs=[
                # x: tiled over the batch axis; feature dim = full extent (6).
                pl.BlockSpec((TB, IN_FEATURES), lambda i: (i, 0)),
                # weight / bias: resident across all grid steps.
                pl.BlockSpec((IN_FEATURES, OUT_FEATURES), lambda i: (0, 0)),
                pl.BlockSpec((1, OUT_FEATURES), lambda i: (0, 0)),
            ],
            out_specs=pl.BlockSpec((TB, OUT_FEATURES), lambda i: (i, 0)),
        ),
        compiler_params=pltpu.CompilerParams(
            dimension_semantics=("parallel",)),
    )(x, w_t, b_2d)

    return out_p[:B]


def init_params(key):
    """Deterministic init mimicking nn.Linear(6, 6) (uniform +/- 1/sqrt(in))."""
    k_w, k_b = jax.random.split(key)
    bound = 1.0 / jnp.sqrt(jnp.float32(IN_FEATURES))
    weight = jax.random.uniform(
        k_w, (OUT_FEATURES, IN_FEATURES), jnp.float32, -bound, bound)
    bias = jax.random.uniform(
        k_b, (OUT_FEATURES,), jnp.float32, -bound, bound)
    return weight, bias


if __name__ == "__main__":
    key = jax.random.PRNGKey(0)
    k_in, k_p = jax.random.split(key)

    B = 4  # small batch (not a multiple of 8 -> exercises batch padding)
    vo = jax.random.normal(k_in, (B, IN_FEATURES), jnp.float32)
    weight, bias = init_params(k_p)

    out = attention_net_forward(vo, weight, bias)
    out = jax.block_until_ready(out)

    # Pure-JAX reference check.
    ref = vo @ weight.T + bias
    assert out.shape == (B, OUT_FEATURES)
    assert jnp.allclose(out, ref, atol=1e-5, rtol=1e-5)

    print("KERNEL_OK")
</pallas_src>

<mosaic_0001>
module attributes {stable_mosaic.version = 11 : i64} {
  func.func @_linear_kernel(%arg0: i32, %arg1: memref<8x6xf32, #tpu.memory_space<vmem>>, %arg2: memref<6x6xf32, #tpu.memory_space<vmem>>, %arg3: memref<1x6xf32, #tpu.memory_space<vmem>>, %arg4: memref<8x6xf32, #tpu.memory_space<vmem>>) attributes {dimension_semantics = [#tpu.dimension_semantics<parallel>], iteration_bounds = array<i64: 1>, scalar_prefetch = 0 : i64, scratch_operands = 0 : i64, tpu.core_type = #tpu.core_type<tc>, window_params = [{transform_indices = @transform_0, window_bounds = array<i64: 8, 6>}, {pipeline_mode = #tpu.pipeline_mode<synchronous>, transform_indices = @transform_1, window_bounds = array<i64: 6, 6>}, {pipeline_mode = #tpu.pipeline_mode<synchronous>, transform_indices = @transform_2, window_bounds = array<i64: 1, 6>}, {transform_indices = @transform_3, window_bounds = array<i64: 8, 6>}]} {
    %c0 = arith.constant 0 : index
    %c0_0 = arith.constant 0 : index
    %0 = vector.load %arg1[%c0, %c0_0] : memref<8x6xf32, #tpu.memory_space<vmem>>, vector<8x6xf32>
    %c0_1 = arith.constant 0 : index
    %c0_2 = arith.constant 0 : index
    %1 = vector.load %arg2[%c0_1, %c0_2] : memref<6x6xf32, #tpu.memory_space<vmem>>, vector<6x6xf32>
    %cst = arith.constant dense<0.000000e+00> : vector<8x6xf32>
    %2 = tpu.matmul %0, %1, %cst {dimension_numbers = #tpu.dot_dimension_numbers<[1], [0], [0], [1], [0, 0, 1, 1], [], []>} : vector<8x6xf32>, vector<6x6xf32>, vector<8x6xf32> -> vector<8x6xf32>
    %c0_3 = arith.constant 0 : index
    %c0_4 = arith.constant 0 : index
    %3 = vector.load %arg3[%c0_3, %c0_4] : memref<1x6xf32, #tpu.memory_space<vmem>>, vector<1x6xf32>
    %4 = vector.broadcast %3 : vector<1x6xf32> to vector<8x6xf32>
    %5 = arith.addf %2, %4 : vector<8x6xf32>
    %c0_5 = arith.constant 0 : index
    %c0_6 = arith.constant 0 : index
    %6 = vector.load %arg4[%c0_5, %c0_6] : memref<8x6xf32, #tpu.memory_space<vmem>>, vector<8x6xf32>
    tpu.vector_store %arg4[%c0_5, %c0_6], %5 {strides = array<i32>} : memref<8x6xf32, #tpu.memory_space<vmem>>, vector<8x6xf32>,
    return
  }
  func.func @transform_0(%arg0: i32) -> (i32, i32) {
    %c0_i32 = arith.constant 0 : i32
    %c0_i32_0 = arith.constant 0 : i32
    return %arg0, %c0_i32 : i32, i32
  }
  func.func @transform_1(%arg0: i32) -> (i32, i32) {
    %c0_i32 = arith.constant 0 : i32
    %c0_i32_0 = arith.constant 0 : i32
    %c0_i32_1 = arith.constant 0 : i32
    return %c0_i32, %c0_i32_0 : i32, i32
  }
  func.func @transform_2(%arg0: i32) -> (i32, i32) {
    %c0_i32 = arith.constant 0 : i32
    %c0_i32_0 = arith.constant 0 : i32
    %c0_i32_1 = arith.constant 0 : i32
    return %c0_i32, %c0_i32_0 : i32, i32
  }
  func.func @transform_3(%arg0: i32) -> (i32, i32) {
    %c0_i32 = arith.constant 0 : i32
    %c0_i32_0 = arith.constant 0 : i32
    return %arg0, %c0_i32 : i32, i32
  }
}

</mosaic_0001>

<llo_original>
// kernel: tpu_custom_call.1
$region0: #{tpu_custom_call.1}
  #allocation0 [shape = 'u32[]', space=smem, size = 0x4, offset = 0x4, fixed_abs, tag = 'smem constant byte address 0x4 - core index']
  #allocation1 [shape = 'u32[144,128]{1,0:T(1,128)}', space=vmem, size = 0x12000, scoped, tag = 'internal scratch']
  %s0 = inlined_call_operand.hbm [shape: f32[8,6], index: 0, kind: input, shape index: {}]
  %s1 = inlined_call_operand.hbm [shape: f32[6,6], index: 1, kind: input, shape index: {}]
  %s2 = inlined_call_operand.vmem [shape: f32[1,6], index: 2, kind: input, shape index: {}]
  %s3 = inlined_call_operand.hbm [shape: f32[8,6], index: 3, kind: output, shape index: {}]
  %s4 = sld [smem:[#allocation0]]
  $region30: #{tpu_custom_call.1} parent=0
    _
  %s6 = ssub.s32 1, %s4
  %s7 = scalar_select 0, %s6, %s4
  $region1: #{tpu_custom_call.1} parent=0
    #allocation2 [shape = 'u8[4096]{0}', space=vmem, size = 0x1000, scoped, tag = 'input window, operand 0, single buffered']
    #allocation3 [shape = 's32[1]{0}', space=sflag, size = 0x4, scoped, tag = 'scoped memory for tpu_custom_call.1']
    #allocation4 [shape = 's32[1]{0}', space=sflag, size = 0x4, scoped, tag = 'scoped memory for tpu_custom_call.1']
    #allocation5 [shape = 'u8[4096]{0}', space=vmem, size = 0x1000, scoped, tag = 'input window, operand 1, single buffered']
    #allocation6 [shape = 's32[1]{0}', space=sflag, size = 0x4, scoped, tag = 'scoped memory for tpu_custom_call.1']
    #allocation7 [shape = 'u8[4096]{0}', space=vmem, size = 0x1000, scoped, tag = 'output window, operand 0, single buffered']
    %8 = vsyncpa [#allocation3], 0
    %9 = vsyncpa [#allocation6], 0
    %10 = vsyncpa [#allocation4], 0
    // Predicated region
    $region2: #{tpu_custom_call.1} parent=1 // pred_check
      _
    $region3: #{tpu_custom_call.1} parent=1 // pred_check_branch
      %12 = sbr.rel (0) target = $region5
    $region4: #{tpu_custom_call.1} parent=1 // pred_region
      %s14 = ssub.s32 128, 128
      %15 = vsyncadd [#allocation3], %s14
      %s17 = sshll.u32 [#allocation2], 4
      %s18 = int_to_ptr.vmem [resolvable:$true] %s17
      %20 = dma.hbm_to_vmem [thread:$0]  %s0, 128, %s18, [#allocation3]
    $region5: #{tpu_custom_call.1} parent=1 // pred_fallthru
      _
    // Predicated region
    $region6: #{tpu_custom_call.1} parent=1 // pred_check
      _
    $region7: #{tpu_custom_call.1} parent=1 // pred_check_branch
      %22 = sbr.rel (0) target = $region9
    $region8: #{tpu_custom_call.1} parent=1 // pred_region
      %s24 = ssub.s32 128, 128
      %25 = vsyncadd [#allocation6], %s24
      %s27 = sshll.u32 [#allocation5], 4
      %s28 = int_to_ptr.vmem [resolvable:$true] %s27
      %30 = dma.hbm_to_vmem [thread:$0]  %s1, 128, %s28, [#allocation6]
    $region9: #{tpu_custom_call.1} parent=1 // pred_fallthru
      _
    // Predicated region
    $region10: #{tpu_custom_call.1} parent=1 // pred_check
      _
    $region11: #{tpu_custom_call.1} parent=1 // pred_check_branch
      %32 = sbr.rel (0) target = $region13
    $region12: #{tpu_custom_call.1} parent=1 // pred_region
      _
    $region13: #{tpu_custom_call.1} parent=1 // pred_fallthru
      _
    // Predicated region
    $region14: #{tpu_custom_call.1} parent=1 // pred_check
      _
    $region15: #{tpu_custom_call.1} parent=1 // pred_check_branch
      %34 = sbr.rel (0) target = $region17
    $region16: #{tpu_custom_call.1} parent=1 // pred_region
      %35 = dma.done [#allocation3], 128
    $region17: #{tpu_custom_call.1} parent=1 // pred_fallthru
      _
    // Predicated region
    $region18: #{tpu_custom_call.1} parent=1 // pred_check
      _
    $region19: #{tpu_custom_call.1} parent=1 // pred_check_branch
      %37 = sbr.rel (0) target = $region21
    $region20: #{tpu_custom_call.1} parent=1 // pred_region
      %38 = dma.done [#allocation6], 128
    $region21: #{tpu_custom_call.1} parent=1 // pred_fallthru
      _
    %v39 = vld [vmem:[#allocation2] sm:$0xff]
    %v40 = vld [vmem:[#allocation5] sm:$0x3f]
    %v41 = vld [vmem:[%s2] sm:$0x1]
    %v43 = vlaneseq
    %v44 = vshrl.u32 %v43, 7
    %v45 = vsub.s32 0, %v44
    %v46 = vrot.slane %v41, %v45
    %vm48 = vcmask 48128
    %v50 = vsel %vm48, %v39, 0
    %vm52 = vcmask 1045504
    %v54 = vsel %vm52, %v40, 0
    %56 = vmatprep.subr.mxu0 0.0
    %57 = vmatpush1.msra.mxu0 %v54
    %58 = vmatprep.subr.mxu0 0.0
    %59 = vmatpush1.msra.mxu0 0.0
    %60 = vmatprep.subr.mxu0 0.0
    %61 = vmatpush1.msra.mxu0 0.0
    %62 = vmatprep.subr.mxu0 0.0
    %63 = vmatpush1.msra.mxu0 0.0
    %64 = vmatprep.subr.mxu0 0.0
    %65 = vmatpush1.msra.mxu0 0.0
    %66 = vmatprep.subr.mxu0 0.0
    %67 = vmatpush1.msra.mxu0 0.0
    %68 = vmatprep.subr.mxu0 0.0
    %69 = vmatpush1.msra.mxu0 0.0
    %70 = vmatprep.subr.mxu0 0.0
    %71 = vmatpush1.msra.mxu0 0.0
    %72 = vmatprep.subr.mxu0 0.0
    %73 = vmatpush1.msra.mxu0 0.0
    %74 = vmatprep.subr.mxu0 0.0
    %75 = vmatpush1.msra.mxu0 0.0
    %76 = vmatprep.subr.mxu0 0.0
    %77 = vmatpush1.msra.mxu0 0.0
    %78 = vmatprep.subr.mxu0 0.0
    %79 = vmatpush1.msra.mxu0 0.0
    %80 = vmatprep.subr.mxu0 0.0
    %81 = vmatpush1.msra.mxu0 0.0
    %82 = vmatprep.subr.mxu0 0.0
    %83 = vmatpush1.msra.mxu0 0.0
    %84 = vmatprep.subr.mxu0 0.0
    %85 = vmatpush1.msra.mxu0 0.0
    %86 = vmatprep.subr.mxu0 0.0
    %87 = vmatpush1.msra.mxu0 0.0
    %88 = vmatprep.subr.mxu0 0.0
    %89 = vmatpush1.msra.mxu0 0.0
    %90 = vmatprep.subr.mxu0 0.0
    %91 = vmatpush1.msra.mxu0 0.0
    %92 = vmatprep.subr.mxu0 0.0
    %93 = vmatpush1.msra.mxu0 0.0
    %94 = vmatprep.subr.mxu0 0.0
    %95 = vmatpush1.msra.mxu0 0.0
    %96 = vmatprep.subr.mxu0 0.0
    %97 = vmatpush1.msra.mxu0 0.0
    %98 = vmatprep.subr.mxu0 0.0
    %99 = vmatpush1.msra.mxu0 0.0
    %100 = vmatprep.subr.mxu0 0.0
    %101 = vmatpush1.msra.mxu0 0.0
    %102 = vmatprep.subr.mxu0 0.0
    %103 = vmatpush1.msra.mxu0 0.0
    %104 = vmatprep.subr.mxu0 0.0
    %105 = vmatpush1.msra.mxu0 0.0
    %106 = vmatprep.subr.mxu0 0.0
    %107 = vmatpush1.msra.mxu0 0.0
    %108 = vmatprep.subr.mxu0 0.0
    %109 = vmatpush1.msra.mxu0 0.0
    %110 = vmatprep.subr.mxu0 0.0
    %111 = vmatpush1.msra.mxu0 0.0
    %112 = vmatprep.subr.mxu0 0.0
    %113 = vmatpush1.msra.mxu0 0.0
    %114 = vmatprep.subr.mxu0 0.0
    %115 = vmatpush1.msra.mxu0 0.0
    %116 = vmatprep.subr.mxu0 0.0
    %117 = vmatpush1.msra.mxu0 0.0
    %118 = vmatprep.subr.mxu0 0.0
    %119 = vmatpush1.msra.mxu0 0.0
    %120 = vmatprep.mubr.f32.mxu0 0.0
    %121 = vmatmul.mubr.f32.gmra.mrb[0].mxu0 %v50
    %v122 = vpop.f32.mrb[0].mxu0
    %v123 = vadd.f32 %v46, %v122
    %v124 = vpop.f32.mrb[0].mxu0
    %125 = vdwg.mxu0
    %126 = vst.msk [vmem:[#allocation7] sm:$0xff] %vm48, %v123
    // Predicated region
    $region22: #{tpu_custom_call.1} parent=1 // pred_check
      _
    $region23: #{tpu_custom_call.1} parent=1 // pred_check_branch
      %128 = sbr.rel (0) target = $region25
    $region24: #{tpu_custom_call.1} parent=1 // pred_region
      %s130 = ssub.s32 128, 128
      %131 = vsyncadd [#allocation4], %s130
      %s133 = sshll.u32 [#allocation7], 4
      %s134 = int_to_ptr.vmem [resolvable:$true] %s133
      %136 = dma.vmem_to_hbm [thread:$0]  %s134, 128, %s3, [#allocation4]
    $region25: #{tpu_custom_call.1} parent=1 // pred_fallthru
      _
    // Predicated region
    $region26: #{tpu_custom_call.1} parent=1 // pred_check
      _
    $region27: #{tpu_custom_call.1} parent=1 // pred_check_branch
      %138 = sbr.rel (0) target = $region29
    $region28: #{tpu_custom_call.1} parent=1 // pred_region
      %139 = dma.done [#allocation4], 128
    $region29: #{tpu_custom_call.1} parent=1 // pred_fallthru
      _
    %140 = vsyncpa [#allocation3], 1
    %141 = vsyncpa [#allocation6], 1
    %142 = vsyncpa [#allocation4], 1

</llo_original>
